<compile_context>
chip_gen: v5e
topology: v5e:2x2
jax: 0.10.0
libtpu: 0.0.40
codegen_flags: <defaults>
</compile_context>

<pallas_src>
import jax
import jax.numpy as jnp
from jax.experimental import pallas as pl
from jax.experimental.pallas import tpu as pltpu


def _sge_kernel(x_ref, w_ref, b_ref, o_ref):
    """One grid step = `gsub` groups of one batch element.

    x_ref / o_ref : (gsub, cg, hw)   group-major channel blocks
    w_ref / b_ref : (gsub, 1, 1)     per-group affine parameters (f32)
    """
    hw = x_ref.shape[-1]
    inv_hw = 1.0 / float(hw)
    inv_hw1 = 1.0 / float(hw - 1)          # torch .std is unbiased (ddof=1)

    xf = x_ref[...].astype(jnp.float32)                     # (gsub, cg, hw)

    # AdaptiveAvgPool2d(1): per-channel spatial mean (single lane reduce).
    m = jnp.sum(xf, axis=-1, keepdims=True) * inv_hw        # (gsub, cg, 1)

    # Per-group spatial saliency map: sum over the group's channels.
    # One sublane reduce per block — no per-group slicing, no MXU needed.
    xn = jnp.sum(xf * m, axis=1, keepdims=True)             # (gsub, 1, hw)

    # Normalize each group's map over the true spatial extent.
    mu = jnp.sum(xn, axis=-1, keepdims=True) * inv_hw       # (gsub, 1, 1)
    tc = xn - mu
    var = jnp.sum(tc * tc, axis=-1, keepdims=True) * inv_hw1
    std = jnp.sqrt(var) + 1e-5                              # (gsub, 1, 1)

    # Fused per-group affine + sigmoid gate: t = tc * (w/std) + b.
    s = jax.nn.sigmoid(tc * (w_ref[...] / std) + b_ref[...])  # (gsub, 1, hw)

    # Modulate: stats stay f32, the big multiply runs in the input dtype
    # (bf16-native VPU on v6e/v7x); single full-block store.
    o_ref[...] = (x_ref[...] * s.astype(x_ref.dtype)).astype(o_ref.dtype)


def _physical_vmem_bytes():
    """Best-effort physical VMEM per TensorCore; conservative 64 MiB fallback."""
    try:
        info = pltpu.get_tpu_info()
        cap = getattr(info, "vmem_capacity_bytes", None)
        if cap:
            return int(cap)
    except Exception:
        pass
    return 64 << 20


def _pick_gsub(groups, bytes_per_group, budget_bytes, batch):
    """Largest #groups per block that fits the budget; prefer >=2 grid steps
    so both v7x TensorCores are used when B == 1."""
    divisors = [d for d in range(1, groups + 1) if groups % d == 0]
    fitting = [d for d in divisors if d * bytes_per_group <= budget_bytes]
    # TODO(synk): if even one group overshoots the budget (huge H*W), fall
    # back here to an HW-chunked two-pass grid instead of a single group.
    cand = fitting if fitting else [1]
    multi = [d for d in cand if batch * (groups // d) >= 2]
    pool = multi if multi else cand
    return max(pool)


def spatial_group_enhance(x, weight, bias, groups, *, block_budget_bytes=None):
    b, c, h, w = x.shape
    assert c % groups == 0
    cg = c // groups
    hw = h * w
    assert hw >= 2, "unbiased std needs at least 2 spatial elements"

    itemsize = jnp.dtype(x.dtype).itemsize
    phys_vmem = _physical_vmem_bytes()
    if block_budget_bytes is None:
        # ~10.7 MiB blocks on 128-MiB parts (v5e/v6e), ~5.3 MiB on v7x (64 MiB
        # per TC): double-buffered in+out plus f32 temporaries stay in budget.
        block_budget_bytes = max(phys_vmem // 12, 2 << 20)

    # When Cg < 8 the VMEM layout pads the sublane dim; account for it.
    cg_pad = ((cg + 7) // 8) * 8 if cg < 8 else cg
    per_group_bytes = cg_pad * hw * max(itemsize, 4)   # f32 temps dominate
    gsub = _pick_gsub(groups, per_group_bytes, block_budget_bytes, b)
    n_gblk = groups // gsub

    # Metadata-only reshapes: the group axis becomes its own array dim so the
    # kernel's channel reduction / gate broadcast are native sublane ops.
    x4 = x.reshape(b, groups, cg, hw)
    w4 = weight.reshape(groups).astype(jnp.float32).reshape(n_gblk, gsub, 1, 1)
    b4 = bias.reshape(groups).astype(jnp.float32).reshape(n_gblk, gsub, 1, 1)

    block_bytes = gsub * cg * hw * itemsize              # true HBM bytes/block
    interm_bytes = gsub * cg_pad * hw * 4                # f32 in-kernel temps
    vmem_limit = 4 * block_bytes + 4 * interm_bytes + (4 << 20)
    vmem_limit = int(min(max(vmem_limit, 32 << 20), (phys_vmem * 3) // 4))

    cost = pl.CostEstimate(
        flops=int(8 * b * c * hw),
        transcendentals=int(b * groups * hw),            # sigmoid
        bytes_accessed=int(2 * b * c * hw * itemsize),
    )

    out = pl.pallas_call(
        _sge_kernel,
        grid_spec=pltpu.PrefetchScalarGridSpec(
            num_scalar_prefetch=0,
            grid=(b, n_gblk),
            in_specs=[
                pl.BlockSpec((None, gsub, cg, hw), lambda i, j: (i, j, 0, 0)),
                pl.BlockSpec((None, gsub, 1, 1), lambda i, j: (j, 0, 0, 0)),
                pl.BlockSpec((None, gsub, 1, 1), lambda i, j: (j, 0, 0, 0)),
            ],
            out_specs=pl.BlockSpec((None, gsub, cg, hw),
                                   lambda i, j: (i, j, 0, 0)),
        ),
        out_shape=jax.ShapeDtypeStruct((b, groups, cg, hw), x.dtype),
        input_output_aliases={0: 0},                      # reuse x's buffer
        compiler_params=pltpu.CompilerParams(
            dimension_semantics=("parallel", "parallel"),
            vmem_limit_bytes=vmem_limit,
        ),
        cost_estimate=cost,
    )(x4, w4, b4)

    return out.reshape(b, c, h, w)


def spatial_group_enhance_ref(x, weight, bias, groups):
    """Pure-JAX transcription of the PyTorch forward (NCHW)."""
    b, c, h, w = x.shape
    xg = x.reshape(b * groups, c // groups, h, w)
    xn = xg * jnp.mean(xg, axis=(2, 3), keepdims=True)
    xn = jnp.sum(xn, axis=1, keepdims=True)
    t = xn.reshape(b * groups, -1)
    t = t - jnp.mean(t, axis=1, keepdims=True)
    std = jnp.std(t, axis=1, keepdims=True, ddof=1) + 1e-5  # torch.std: unbiased
    t = t / std
    t = t.reshape(b, groups, h, w)
    t = t * weight.reshape(1, groups, 1, 1) + bias.reshape(1, groups, 1, 1)
    t = t.reshape(b * groups, 1, h, w)
    xg = xg * jax.nn.sigmoid(t)
    return xg.reshape(b, c, h, w)


def _run_case(key, b, c, h, w, groups):
    kx, kw, kb = jax.random.split(key, 3)
    x = jax.random.normal(kx, (b, c, h, w), dtype=jnp.float32)
    # Parameter shapes from __init__: weight (1, G, 1, 1), bias (1, G, 1, 1).
    weight = 0.5 * jax.random.normal(kw, (1, groups, 1, 1), dtype=jnp.float32)
    bias = 1.0 + 0.1 * jax.random.normal(kb, (1, groups, 1, 1), dtype=jnp.float32)

    # Reference first (the kernel aliases its (reshaped) input buffer).
    ref = spatial_group_enhance_ref(x, weight, bias, groups)

    out = spatial_group_enhance(x, weight, bias, groups)
    out = jax.block_until_ready(out)

    assert out.shape == (b, c, h, w)
    assert jnp.allclose(out, ref, atol=2e-5, rtol=2e-5), (
        f"mismatch vs reference for shape {(b, c, h, w)}")


if __name__ == "__main__":
    key = jax.random.PRNGKey(0)
    k1, k2, k3 = jax.random.split(key, 3)

    # Case 1: H*W a multiple of 128 (lane-dense blocks).
    _run_case(k1, b=2, c=16, h=16, w=16, groups=4)

    # Case 2: H*W = 100 -> full-dim (unpadded) partial-lane block path.
    _run_case(k2, b=2, c=16, h=10, w=10, groups=4)

    # Case 3: B = 1 -> group-block split gives >= 2 grid steps (n_gblk > 1).
    _run_case(k3, b=1, c=32, h=8, w=8, groups=8)

    print("KERNEL_OK")
</pallas_src>

<mosaic_0001>
module attributes {stable_mosaic.version = 11 : i64} {
  func.func @_sge_kernel(%arg0: i32, %arg1: i32, %arg2: memref<1x4x4x256xf32, #tpu.memory_space<vmem>>, %arg3: memref<1x4x1x1xf32, #tpu.memory_space<vmem>>, %arg4: memref<1x4x1x1xf32, #tpu.memory_space<vmem>>, %arg5: memref<1x4x4x256xf32, #tpu.memory_space<vmem>>) attributes {dimension_semantics = [#tpu.dimension_semantics<parallel>, #tpu.dimension_semantics<parallel>], iteration_bounds = array<i64: 2, 1>, scalar_prefetch = 0 : i64, scratch_operands = 0 : i64, tpu.core_type = #tpu.core_type<tc>, window_params = [{transform_indices = @transform_0, window_bounds = array<i64: 1, 4, 4, 256>}, {transform_indices = @transform_1, window_bounds = array<i64: 1, 4, 1, 1>}, {transform_indices = @transform_2, window_bounds = array<i64: 1, 4, 1, 1>}, {transform_indices = @transform_3, window_bounds = array<i64: 1, 4, 4, 256>}]} {
    %c0 = arith.constant 0 : index
    %c0_0 = arith.constant 0 : index
    %c0_1 = arith.constant 0 : index
    %c0_2 = arith.constant 0 : index
    %0 = vector.load %arg2[%c0, %c0_0, %c0_1, %c0_2] : memref<1x4x4x256xf32, #tpu.memory_space<vmem>>, vector<1x4x4x256xf32>
    %1 = vector.shape_cast %0 : vector<1x4x4x256xf32> to vector<4x4x256xf32>
    %cst = arith.constant dense<0.000000e+00> : vector<4x4xf32>
    %2 = vector.multi_reduction <add>, %1, %cst [2] : vector<4x4x256xf32> to vector<4x4xf32>
    %3 = vector.shape_cast %2 : vector<4x4xf32> to vector<4x4x1xf32>
    %cst_3 = arith.constant 3.906250e-03 : f32
    %4 = vector.broadcast %cst_3 : f32 to vector<4x4x1xf32>
    %5 = arith.mulf %3, %4 : vector<4x4x1xf32>
    %6 = vector.broadcast %5 : vector<4x4x1xf32> to vector<4x4x256xf32>
    %7 = arith.mulf %1, %6 : vector<4x4x256xf32>
    %cst_4 = arith.constant dense<0.000000e+00> : vector<4x256xf32>
    %8 = vector.multi_reduction <add>, %7, %cst_4 [1] : vector<4x4x256xf32> to vector<4x256xf32>
    %9 = vector.shape_cast %8 : vector<4x256xf32> to vector<4x1x256xf32>
    %cst_5 = arith.constant dense<0.000000e+00> : vector<4x1xf32>
    %10 = vector.multi_reduction <add>, %9, %cst_5 [2] : vector<4x1x256xf32> to vector<4x1xf32>
    %11 = vector.shape_cast %10 : vector<4x1xf32> to vector<4x1x1xf32>
    %cst_6 = arith.constant 3.906250e-03 : f32
    %12 = vector.broadcast %cst_6 : f32 to vector<4x1x1xf32>
    %13 = arith.mulf %11, %12 : vector<4x1x1xf32>
    %14 = vector.broadcast %13 : vector<4x1x1xf32> to vector<4x1x256xf32>
    %15 = arith.subf %9, %14 : vector<4x1x256xf32>
    %16 = arith.mulf %15, %15 : vector<4x1x256xf32>
    %cst_7 = arith.constant dense<0.000000e+00> : vector<4x1xf32>
    %17 = vector.multi_reduction <add>, %16, %cst_7 [2] : vector<4x1x256xf32> to vector<4x1xf32>
    %18 = vector.shape_cast %17 : vector<4x1xf32> to vector<4x1x1xf32>
    %cst_8 = arith.constant 0.00392156886 : f32
    %19 = vector.broadcast %cst_8 : f32 to vector<4x1x1xf32>
    %20 = arith.mulf %18, %19 : vector<4x1x1xf32>
    %21 = math.sqrt %20 : vector<4x1x1xf32>
    %cst_9 = arith.constant 9.99999974E-6 : f32
    %22 = vector.broadcast %cst_9 : f32 to vector<4x1x1xf32>
    %23 = arith.addf %21, %22 : vector<4x1x1xf32>
    %c0_10 = arith.constant 0 : index
    %c0_11 = arith.constant 0 : index
    %c0_12 = arith.constant 0 : index
    %c0_13 = arith.constant 0 : index
    %24 = vector.load %arg3[%c0_10, %c0_11, %c0_12, %c0_13] : memref<1x4x1x1xf32, #tpu.memory_space<vmem>>, vector<1x4x1x1xf32>
    %25 = vector.shape_cast %24 : vector<1x4x1x1xf32> to vector<4x1x1xf32>
    %26 = arith.divf %25, %23 : vector<4x1x1xf32>
    %27 = vector.broadcast %26 : vector<4x1x1xf32> to vector<4x1x256xf32>
    %28 = arith.mulf %15, %27 : vector<4x1x256xf32>
    %c0_14 = arith.constant 0 : index
    %c0_15 = arith.constant 0 : index
    %c0_16 = arith.constant 0 : index
    %c0_17 = arith.constant 0 : index
    %29 = vector.load %arg4[%c0_14, %c0_15, %c0_16, %c0_17] : memref<1x4x1x1xf32, #tpu.memory_space<vmem>>, vector<1x4x1x1xf32>
    %30 = vector.shape_cast %29 : vector<1x4x1x1xf32> to vector<4x1x1xf32>
    %31 = vector.broadcast %30 : vector<4x1x1xf32> to vector<4x1x256xf32>
    %32 = arith.addf %28, %31 : vector<4x1x256xf32>
    %33 = arith.negf %32 : vector<4x1x256xf32>
    %34 = math.exp %33 : vector<4x1x256xf32>
    %cst_18 = arith.constant 1.000000e+00 : f32
    %35 = vector.broadcast %cst_18 : f32 to vector<4x1x256xf32>
    %36 = arith.addf %35, %34 : vector<4x1x256xf32>
    %37 = arith.divf %35, %36 : vector<4x1x256xf32>
    %c0_19 = arith.constant 0 : index
    %c0_20 = arith.constant 0 : index
    %c0_21 = arith.constant 0 : index
    %c0_22 = arith.constant 0 : index
    %38 = vector.load %arg2[%c0_19, %c0_20, %c0_21, %c0_22] : memref<1x4x4x256xf32, #tpu.memory_space<vmem>>, vector<1x4x4x256xf32>
    %39 = vector.shape_cast %38 : vector<1x4x4x256xf32> to vector<4x4x256xf32>
    %40 = vector.broadcast %37 : vector<4x1x256xf32> to vector<4x4x256xf32>
    %41 = arith.mulf %39, %40 : vector<4x4x256xf32>
    %c0_23 = arith.constant 0 : index
    %c0_24 = arith.constant 0 : index
    %c0_25 = arith.constant 0 : index
    %c0_26 = arith.constant 0 : index
    %42 = vector.load %arg5[%c0_23, %c0_24, %c0_25, %c0_26] : memref<1x4x4x256xf32, #tpu.memory_space<vmem>>, vector<1x4x4x256xf32>
    %43 = vector.shape_cast %42 : vector<1x4x4x256xf32> to vector<4x4x256xf32>
    %44 = vector.shape_cast %41 : vector<4x4x256xf32> to vector<1x4x4x256xf32>
    tpu.vector_store %arg5[%c0_23, %c0_24, %c0_25, %c0_26], %44 {strides = array<i32>} : memref<1x4x4x256xf32, #tpu.memory_space<vmem>>, vector<1x4x4x256xf32>,
    return
  }
  func.func @transform_0(%arg0: i32, %arg1: i32) -> (i32, i32, i32, i32) {
    %c0_i32 = arith.constant 0 : i32
    %c0_i32_0 = arith.constant 0 : i32
    %c0_i32_1 = arith.constant 0 : i32
    return %arg0, %arg1, %c0_i32, %c0_i32_0 : i32, i32, i32, i32
  }
  func.func @transform_1(%arg0: i32, %arg1: i32) -> (i32, i32, i32, i32) {
    %c0_i32 = arith.constant 0 : i32
    %c0_i32_0 = arith.constant 0 : i32
    %c0_i32_1 = arith.constant 0 : i32
    %c0_i32_2 = arith.constant 0 : i32
    return %arg1, %c0_i32, %c0_i32_0, %c0_i32_1 : i32, i32, i32, i32
  }
  func.func @transform_2(%arg0: i32, %arg1: i32) -> (i32, i32, i32, i32) {
    %c0_i32 = arith.constant 0 : i32
    %c0_i32_0 = arith.constant 0 : i32
    %c0_i32_1 = arith.constant 0 : i32
    %c0_i32_2 = arith.constant 0 : i32
    return %arg1, %c0_i32, %c0_i32_0, %c0_i32_1 : i32, i32, i32, i32
  }
  func.func @transform_3(%arg0: i32, %arg1: i32) -> (i32, i32, i32, i32) {
    %c0_i32 = arith.constant 0 : i32
    %c0_i32_0 = arith.constant 0 : i32
    %c0_i32_1 = arith.constant 0 : i32
    return %arg0, %arg1, %c0_i32, %c0_i32_0 : i32, i32, i32, i32
  }
}

</mosaic_0001>

<llo_original>
// kernel: tpu_custom_call.1
$region0: #{tpu_custom_call.1}
  #allocation0 [shape = 'u32[]', space=smem, size = 0x4, offset = 0x4, fixed_abs, tag = 'smem constant byte address 0x4 - core index']
  #allocation1 [shape = 'u32[72,128]{1,0:T(1,128)}', space=vmem, size = 0x9000, scoped, tag = 'internal scratch']
  %s0 = inlined_call_operand.hbm [shape: f32[2,4,4,256], index: 0, kind: input, shape index: {}, may-alias: {0,3}]
  %s1 = inlined_call_operand.vmem [shape: f32[1,4,1,1], index: 1, kind: input, shape index: {}]
  %s2 = inlined_call_operand.vmem [shape: f32[1,4,1,1], index: 2, kind: input, shape index: {}]
  %s3 = inlined_call_operand.hbm [shape: f32[2,4,4,256], index: 3, kind: output, shape index: {}, may-alias: {0,3}]
  %s4 = sld [smem:[#allocation0]]
  $region49: #{tpu_custom_call.1} parent=0
    _
  %s6 = ssub.s32 1, %s4
  %s7 = scalar_select 0, %s6, %s4
  $region1: #{tpu_custom_call.1} parent=0
    #allocation2 [shape = 'u8[32768]{0}', space=vmem, size = 0x8000, scoped, tag = 'input window, operand 0']
    #allocation3 [shape = 's32[2]{0}', space=sflag, size = 0x8, scoped, tag = 'scoped memory for tpu_custom_call.1']
    #allocation4 [shape = 's32[2]{0}', space=sflag, size = 0x8, scoped, tag = 'scoped memory for tpu_custom_call.1']
    #allocation5 [shape = 'u8[32768]{0}', space=vmem, size = 0x8000, scoped, tag = 'output window, operand 0']
    %8 = vsyncpa [#allocation3], 0
    %s9 = scalar_lea.sflag [#allocation3], 1
    %10 = vsyncpa %s9, 0
    %11 = vsyncpa [#allocation4], 0
    %s12 = scalar_lea.sflag [#allocation4], 1
    %13 = vsyncpa %s12, 0
    loop: start=0, step=1, limit=4
    $region2: #{tpu_custom_call.1} parent=1 // loop_pre_header
      _
    $region3: #{tpu_custom_call.1} parent=1 // loop_header
      %s15 = sphi 0, %s19
      %p16 = scmp.ge.s32.totalorder %s15, 4
      %s22 = sphi 0, %s34
      %s23 = sphi 0, %s30
      %s24 = sphi 0, %s22
      %s25 = sphi 0, %s23
      %s26 = sphi 0, %s24
      %s27 = sphi 0, %s25
      %s39 = sphi 0, %s41
      %s42 = sphi 0, %s39
      %s43 = sphi 0, %s42
      %s59 = sphi 0, %s43
      %s65 = sphi 0, %s67
      %s68 = sphi 0, %s65
      %s69 = sphi 0, %s68
      %s85 = sphi 0, %s69
      %s91 = sphi 0, %s93
      %s94 = sphi 0, %s91
      %s95 = sphi 0, %s94
      %s111 = sphi 0, %s95
      %s119 = sphi 0, %s121
      %s122 = sphi 0, %s119
      %s123 = sphi 0, %s122
      %s139 = sphi 0, %s123
    $region4: #{tpu_custom_call.1} parent=1 // loop_header_branch
      %18 = sbr.rel (%p16) target = $region8
    $region5: #{tpu_custom_call.1} parent=1 // loop_body
      %s20 = ssub.s32 %s15, 1
      %s21 = ssub.s32 %s15, 2
      %s28 = sadd.s32 1, %s23
      %p29 = scmp.ge.s32.totalorder %s28, 1
      %s30 = scalar_select %p29, 0, %s28
      %s31 = sadd.s32 1, %s22
      %s32 = scalar_select %p29, %s31, %s22
      %p33 = scmp.ge.s32.totalorder %s32, 2
      %s34 = scalar_select %p33, 0, %s32
      %s35 = ssub.s32 %s22, %s34
      %s36 = ssub.s32 %s23, %s30
      %s37 = sor.u32 %s35, %s36
      %p38 = scmp.eq.s32.totalorder %s37, 0
      %s40 = sadd.s32 %s39, 1
      %s41 = scalar_select %p38, %s39, %s40
      %p44 = pneg %p38
      %p45 = scmp.eq.s32.totalorder %s15, 1
      %p46 = por %p44, %p45
      %p47 = scmp.ne.s32.totalorder %s39, %s42
      %p48 = scmp.eq.s32.totalorder %s15, 0
      %p49 = por %p47, %p48
      %p50 = scmp.ne.s32.totalorder %s39, %s42
      %p51 = scmp.eq.s32.totalorder %s20, 1
      %p52 = por %p50, %p51
      %p53 = scmp.ne.s32.totalorder %s42, %s43
      %p54 = scmp.eq.s32.totalorder %s20, 0
      %p55 = por %p53, %p54
      %p56 = scmp.ne.s32.totalorder %s42, %s43
      %p57 = scmp.eq.s32.totalorder %s21, 1
      %p58 = por %p56, %p57
      %p60 = scmp.ne.s32.totalorder %s43, %s59
      %p61 = scmp.eq.s32.totalorder %s21, 0
      %p62 = por %p60, %p61
      %s63 = ssub.s32 %s23, %s30
      %p64 = scmp.eq.s32.totalorder %s63, 0
      %s66 = sadd.s32 %s65, 1
      %s67 = scalar_select %p64, %s65, %s66
      %p70 = pneg %p64
      %p71 = scmp.eq.s32.totalorder %s15, 1
      %p72 = por %p70, %p71
      %p73 = scmp.ne.s32.totalorder %s65, %s68
      %p74 = scmp.eq.s32.totalorder %s15, 0
      %p75 = por %p73, %p74
      %p76 = scmp.ne.s32.totalorder %s65, %s68
      %p77 = scmp.eq.s32.totalorder %s20, 1
      %p78 = por %p76, %p77
      %p79 = scmp.ne.s32.totalorder %s68, %s69
      %p80 = scmp.eq.s32.totalorder %s20, 0
      %p81 = por %p79, %p80
      %p82 = scmp.ne.s32.totalorder %s68, %s69
      %p83 = scmp.eq.s32.totalorder %s21, 1
      %p84 = por %p82, %p83
      %p86 = scmp.ne.s32.totalorder %s69, %s85
      %p87 = scmp.eq.s32.totalorder %s21, 0
      %p88 = por %p86, %p87
      %s89 = ssub.s32 %s23, %s30
      %p90 = scmp.eq.s32.totalorder %s89, 0
      %s92 = sadd.s32 %s91, 1
      %s93 = scalar_select %p90, %s91, %s92
      %p96 = pneg %p90
      %p97 = scmp.eq.s32.totalorder %s15, 1
      %p98 = por %p96, %p97
      %p99 = scmp.ne.s32.totalorder %s91, %s94
      %p100 = scmp.eq.s32.totalorder %s15, 0
      %p101 = por %p99, %p100
      %p102 = scmp.ne.s32.totalorder %s91, %s94
      %p103 = scmp.eq.s32.totalorder %s20, 1
      %p104 = por %p102, %p103
      %p105 = scmp.ne.s32.totalorder %s94, %s95
      %p106 = scmp.eq.s32.totalorder %s20, 0
      %p107 = por %p105, %p106
      %p108 = scmp.ne.s32.totalorder %s94, %s95
      %p109 = scmp.eq.s32.totalorder %s21, 1
      %p110 = por %p108, %p109
      %p112 = scmp.ne.s32.totalorder %s95, %s111
      %p113 = scmp.eq.s32.totalorder %s21, 0
      %p114 = por %p112, %p113
      %s115 = ssub.s32 %s22, %s34
      %s116 = ssub.s32 %s23, %s30
      %s117 = sor.u32 %s115, %s116
      %p118 = scmp.eq.s32.totalorder %s117, 0
      %s120 = sadd.s32 %s119, 1
      %s121 = scalar_select %p118, %s119, %s120
      %p124 = pneg %p118
      %p125 = scmp.eq.s32.totalorder %s15, 1
      %p126 = por %p124, %p125
      %p127 = scmp.ne.s32.totalorder %s119, %s122
      %p128 = scmp.eq.s32.totalorder %s15, 0
      %p129 = por %p127, %p128
      %p130 = scmp.ne.s32.totalorder %s119, %s122
      %p131 = scmp.eq.s32.totalorder %s20, 1
      %p132 = por %p130, %p131
      %p133 = scmp.ne.s32.totalorder %s122, %s123
      %p134 = scmp.eq.s32.totalorder %s20, 0
      %p135 = por %p133, %p134
      %p136 = scmp.ne.s32.totalorder %s122, %s123
      %p137 = scmp.eq.s32.totalorder %s21, 1
      %p138 = por %p136, %p137
      %p140 = scmp.ne.s32.totalorder %s123, %s139
      %p141 = scmp.eq.s32.totalorder %s21, 0
      %p142 = por %p140, %p141
      %p143 = scmp.le.s32.totalorder 1, %s15
      %p144 = scmp.lt.s32.totalorder %s15, 3
      %p145 = pnand %p143, %p144
      %p146 = pneg %p145
      // Predicated region
      $region9: #{tpu_custom_call.1} parent=5 // pred_check
        _
      $region10: #{tpu_custom_call.1} parent=5 // pred_check_branch
        %148 = sbr.rel (%p145) target = $region12
      $region11: #{tpu_custom_call.1} parent=5 // pred_region
        %s149 = ssub.s32 %s15, 1
        // Predicated region
        $region13: #{tpu_custom_call.1} parent=11 // pred_check
          %p150 = pneg %p81
        $region14: #{tpu_custom_call.1} parent=11 // pred_check_branch
          %152 = sbr.rel (%p150) target = $region16
        $region15: #{tpu_custom_call.1} parent=11 // pred_region
          %p153 = scmp.lt.s32.totalorder %s25, 0
          %s154 = scalar_select %p153, %s25, 0
          %s155 = smul.addr %s154, 4
          %s156 = scalar_lea.vmem %s1, %s155
        $region16: #{tpu_custom_call.1} parent=11 // pred_fallthru
          _
        // Predicated region
        $region17: #{tpu_custom_call.1} parent=11 // pred_check
          %p157 = pneg %p107
        $region18: #{tpu_custom_call.1} parent=11 // pred_check_branch
          %159 = sbr.rel (%p157) target = $region20
        $region19: #{tpu_custom_call.1} parent=11 // pred_region
          %p160 = scmp.lt.s32.totalorder %s25, 0
          %s161 = scalar_select %p160, %s25, 0
          %s162 = smul.addr %s161, 4
          %s163 = scalar_lea.vmem %s2, %s162
        $region20: #{tpu_custom_call.1} parent=11 // pred_fallthru
          _
      $region12: #{tpu_custom_call.1} parent=5 // pred_fallthru
        _
      %p164 = scmp.lt.s32.totalorder %s15, 2
      // Predicated region
      $region21: #{tpu_custom_call.1} parent=5 // pred_check
        %p165 = pneg %p164
      $region22: #{tpu_custom_call.1} parent=5 // pred_check_branch
        %167 = sbr.rel (%p165) target = $region24
      $region23: #{tpu_custom_call.1} parent=5 // pred_region
        // Predicated region
        $region25: #{tpu_custom_call.1} parent=23 // pred_check
          %p168 = pneg %p49
        $region26: #{tpu_custom_call.1} parent=23 // pred_check_branch
          %170 = sbr.rel (%p168) target = $region28
        $region27: #{tpu_custom_call.1} parent=23 // pred_region
          %s171 = sand.u32 %s39, 1
          %s172 = scalar_lea.sflag [#allocation3], %s171
          %s173 = sand.u32 %s39, 1
          %s174 = smul.addr %s173, 32
          %s175 = scalar_lea.vmem [#allocation2], %s174
          %s176 = smul.u32 4, %s23
          %178 = vsyncadd %s172, 0
          %s179 = smul.addr %s176, 2
          %s180 = smul.addr %s22, 8
          %s181 = sadd.s32 %s179, %s180
          %s182 = smul.addr %s181, 4
          %s183 = scalar_lea.hbm %s0, %s182
          %s184 = sshll.u32 %s183, 4
          %s185 = int_to_ptr.hbm [resolvable:$true] %s184
          %s186 = sshll.u32 %s175, 4
          %s187 = int_to_ptr.vmem [resolvable:$true] %s186
          %192 = dma.hbm_to_vmem [thread:$0]  %s185, 512, %s187, %s172, 128, 128, 8
        $region28: #{tpu_custom_call.1} parent=23 // pred_fallthru
          _
      $region24: #{tpu_custom_call.1} parent=5 // pred_fallthru
        _
      %p193 = scmp.le.s32.totalorder 1, %s15
      %p194 = scmp.lt.s32.totalorder %s15, 3
      %p195 = pnand %p193, %p194
      %p196 = pneg %p195
      // Predicated region
      $region29: #{tpu_custom_call.1} parent=5 // pred_check
        _
      $region30: #{tpu_custom_call.1} parent=5 // pred_check_branch
        %198 = sbr.rel (%p195) target = $region32
      $region31: #{tpu_custom_call.1} parent=5 // pred_region
        %s199 = ssub.s32 %s15, 1
        %s200 = sand.u32 %s42, 1
        %s201 = scalar_lea.sflag [#allocation3], %s200
        %s202 = sand.u32 %s42, 1
        %s203 = smul.addr %s202, 32
        %s204 = scalar_lea.vmem [#allocation2], %s203
        // Predicated region
        $region33: #{tpu_custom_call.1} parent=31 // pred_check
          %p205 = pneg %p55
        $region34: #{tpu_custom_call.1} parent=31 // pred_check_branch
          %207 = sbr.rel (%p205) target = $region36
        $region35: #{tpu_custom_call.1} parent=31 // pred_region
          %209 = dma.done %s201, 512
        $region36: #{tpu_custom_call.1} parent=31 // pred_fallthru
          _
        %s210 = sand.u32 %s42, 1
        %s211 = scalar_lea.sflag [#allocation3], %s210
        %s212 = sand.u32 %s42, 1
        %s213 = smul.addr %s212, 32
        %s214 = scalar_lea.vmem [#allocation2], %s213
        %p215 = pneg %p55
        %p216 = pneg %p52
        %p217 = scmp.lt.s32.totalorder %s25, 0
        %s218 = scalar_select %p217, %s25, 0
        %s219 = smul.addr %s218, 4
        %s220 = scalar_lea.vmem %s1, %s219
        %p221 = pneg %p81
        %p222 = pneg %p78
        %p223 = scmp.lt.s32.totalorder %s25, 0
        %s224 = scalar_select %p223, %s25, 0
        %s225 = smul.addr %s224, 4
        %s226 = scalar_lea.vmem %s2, %s225
        %p227 = pneg %p107
        %p228 = pneg %p104
        %p229 = pneg %p135
        %p230 = pneg %p132
        %s231 = sand.u32 %s122, 1
        %s232 = scalar_lea.sflag [#allocation4], %s231
        %s233 = sand.u32 %s122, 1
        %s234 = smul.addr %s233, 32
        %s235 = scalar_lea.vmem [#allocation5], %s234
        %s236 = smul.u32 4, %s25
        %p237 = scmp.lt.s32.totalorder %s25, 0
        %s238 = scalar_select %p237, %s25, 0
        %s239 = smul.addr %s238, 4
        %s240 = scalar_lea.vmem %s1, %s239
        %p241 = scmp.lt.s32.totalorder %s25, 0
        %s242 = scalar_select %p241, %s25, 0
        %s243 = smul.addr %s242, 4
        %s244 = scalar_lea.vmem %s2, %s243
        %s245 = smul.u32 4, %s25
        %v246 = vld [vmem:[%s204] sm:$0xff]
        %v247 = vld [vmem:[%s204 + $0x8] sm:$0xff]
        %v248 = vld [vmem:[%s204 + $0x10] sm:$0xff]
        %v249 = vld [vmem:[%s204 + $0x18] sm:$0xff]
        %254 = vst [vmem:[#allocation1] ss:$2 sm:$0xff] %v246
        %v255 = vld.sshfl [vmem:[#allocation1] sm:$0xff pattern:$0x75316420]
        %v256 = vld.sshfl [vmem:[#allocation1 + $0x8] sm:$0xff pattern:$0x75316420]
        %s257 = scalar_lea.vmem [#allocation1], 16
        %258 = vst [vmem:[%s257] ss:$2 sm:$0xff] %v247
        %v259 = vld.sshfl [vmem:[#allocation1 + $0x10] sm:$0xff pattern:$0x75316420]
        %v260 = vld.sshfl [vmem:[#allocation1 + $0x18] sm:$0xff pattern:$0x75316420]
        %s261 = scalar_lea.vmem [#allocation1], 32
        %262 = vst [vmem:[%s261] ss:$2 sm:$0xff] %v248
        %v263 = vld.sshfl [vmem:[#allocation1 + $0x20] sm:$0xff pattern:$0x75316420]
        %v264 = vld.sshfl [vmem:[#allocation1 + $0x28] sm:$0xff pattern:$0x75316420]
        %s265 = scalar_lea.vmem [#allocation1], 48
        %266 = vst [vmem:[%s265] ss:$2 sm:$0xff] %v249
        %v267 = vld.sshfl [vmem:[#allocation1 + $0x30] sm:$0xff pattern:$0x75316420]
        %v268 = vld.sshfl [vmem:[#allocation1 + $0x38] sm:$0xff pattern:$0x75316420]
        %vm277 = vcmask 1043456
        %v278 = vsel %vm277, %v255, 0.0
        %v279 = vsel %vm277, %v256, 0.0
        %v280 = vadd.f32 %v278, %v279
        %281 = vadd.xlane.f32.xlu0 %v280
        %v282 = vpop.xlane.xlu0 %281
        %v283 = vsel %vm277, %v259, 0.0
        %v284 = vsel %vm277, %v260, 0.0
        %v285 = vadd.f32 %v283, %v284
        %286 = vadd.xlane.f32.xlu0 %v285
        %v287 = vpop.xlane.xlu0 %286
        %v288 = vsel %vm277, %v263, 0.0
        %v289 = vsel %vm277, %v264, 0.0
        %v290 = vadd.f32 %v288, %v289
        %291 = vadd.xlane.f32.xlu0 %v290
        %v292 = vpop.xlane.xlu0 %291
        %v293 = vsel %vm277, %v267, 0.0
        %v294 = vsel %vm277, %v268, 0.0
        %v295 = vadd.f32 %v293, %v294
        %296 = vadd.xlane.f32.xlu0 %v295
        %v297 = vpop.xlane.xlu0 %296
        %v298 = vmul.f32 %v282, 0.00390625
        %v299 = vmul.f32 %v287, 0.00390625
        %v300 = vmul.f32 %v292, 0.00390625
        %v301 = vmul.f32 %v297, 0.00390625
        %v307 = vunpack.c.l.s4 839922192
        %v308 = vunpack.c.0.s8 %v307
        %v309 = vperm.slane %v298, %v308
        %v311 = vunpack.c.l.s4 839922192
        %v312 = vunpack.c.0.s8 %v311
        %v313 = vperm.slane %v299, %v312
        %v315 = vunpack.c.l.s4 839922192
        %v316 = vunpack.c.0.s8 %v315
        %v317 = vperm.slane %v300, %v316
        %v319 = vunpack.c.l.s4 839922192
        %v320 = vunpack.c.0.s8 %v319
        %v321 = vperm.slane %v301, %v320
        %v326 = vmul.f32 %v246, %v309
        %v327 = vmul.f32 %v247, %v313
        %v328 = vmul.f32 %v248, %v317
        %v329 = vmul.f32 %v249, %v321
        %334 = vst [vmem:[#allocation1] ss:$2 sm:$0xff] %v326
        %v335 = vld.sshfl [vmem:[#allocation1] sm:$0xff pattern:$0x75316420]
        %v336 = vld.sshfl [vmem:[#allocation1 + $0x8] sm:$0xff pattern:$0x75316420]
        %s337 = scalar_lea.vmem [#allocation1], 16
        %338 = vst [vmem:[%s337] ss:$2 sm:$0xff] %v327
        %v339 = vld.sshfl [vmem:[#allocation1 + $0x10] sm:$0xff pattern:$0x75316420]
        %v340 = vld.sshfl [vmem:[#allocation1 + $0x18] sm:$0xff pattern:$0x75316420]
        %s341 = scalar_lea.vmem [#allocation1], 32
        %342 = vst [vmem:[%s341] ss:$2 sm:$0xff] %v328
        %v343 = vld.sshfl [vmem:[#allocation1 + $0x20] sm:$0xff pattern:$0x75316420]
        %v344 = vld.sshfl [vmem:[#allocation1 + $0x28] sm:$0xff pattern:$0x75316420]
        %s345 = scalar_lea.vmem [#allocation1], 48
        %346 = vst [vmem:[%s345] ss:$2 sm:$0xff] %v329
        %v347 = vld.sshfl [vmem:[#allocation1 + $0x30] sm:$0xff pattern:$0x75316420]
        %v348 = vld.sshfl [vmem:[#allocation1 + $0x38] sm:$0xff pattern:$0x75316420]
        %v357 = vsel %vm277, %v335, 0.0
        %v358 = vrot.slane %v357, 4
        %v359 = vadd.f32 %v357, %v358
        %v360 = vrot.slane %v359, 2
        %v361 = vadd.f32 %v359, %v360
        %v362 = vrot.slane %v361, 1
        %v363 = vadd.f32 %v361, %v362
        %v364 = vsel %vm277, %v336, 0.0
        %v365 = vrot.slane %v364, 4
        %v366 = vadd.f32 %v364, %v365
        %v367 = vrot.slane %v366, 2
        %v368 = vadd.f32 %v366, %v367
        %v369 = vrot.slane %v368, 1
        %v370 = vadd.f32 %v368, %v369
        %v371 = vsel %vm277, %v339, 0.0
        %v372 = vrot.slane %v371, 4
        %v373 = vadd.f32 %v371, %v372
        %v374 = vrot.slane %v373, 2
        %v375 = vadd.f32 %v373, %v374
        %v376 = vrot.slane %v375, 1
        %v377 = vadd.f32 %v375, %v376
        %v378 = vsel %vm277, %v340, 0.0
        %v379 = vrot.slane %v378, 4
        %v380 = vadd.f32 %v378, %v379
        %v381 = vrot.slane %v380, 2
        %v382 = vadd.f32 %v380, %v381
        %v383 = vrot.slane %v382, 1
        %v384 = vadd.f32 %v382, %v383
        %v385 = vsel %vm277, %v343, 0.0
        %v386 = vrot.slane %v385, 4
        %v387 = vadd.f32 %v385, %v386
        %v388 = vrot.slane %v387, 2
        %v389 = vadd.f32 %v387, %v388
        %v390 = vrot.slane %v389, 1
        %v391 = vadd.f32 %v389, %v390
        %v392 = vsel %vm277, %v344, 0.0
        %v393 = vrot.slane %v392, 4
        %v394 = vadd.f32 %v392, %v393
        %v395 = vrot.slane %v394, 2
        %v396 = vadd.f32 %v394, %v395
        %v397 = vrot.slane %v396, 1
        %v398 = vadd.f32 %v396, %v397
        %v399 = vsel %vm277, %v347, 0.0
        %v400 = vrot.slane %v399, 4
        %v401 = vadd.f32 %v399, %v400
        %v402 = vrot.slane %v401, 2
        %v403 = vadd.f32 %v401, %v402
        %v404 = vrot.slane %v403, 1
        %v405 = vadd.f32 %v403, %v404
        %v406 = vsel %vm277, %v348, 0.0
        %v407 = vrot.slane %v406, 4
        %v408 = vadd.f32 %v406, %v407
        %v409 = vrot.slane %v408, 2
        %v410 = vadd.f32 %v408, %v409
        %v411 = vrot.slane %v410, 1
        %v412 = vadd.f32 %v410, %v411
        %v413 = vadd.f32 %v363, %v370
        %414 = vadd.xlane.f32.xlu0 %v413
        %v415 = vpop.xlane.xlu0 %414
        %v416 = vadd.f32 %v377, %v384
        %417 = vadd.xlane.f32.xlu0 %v416
        %v418 = vpop.xlane.xlu0 %417
        %v419 = vadd.f32 %v391, %v398
        %420 = vadd.xlane.f32.xlu0 %v419
        %v421 = vpop.xlane.xlu0 %420
        %v422 = vadd.f32 %v405, %v412
        %423 = vadd.xlane.f32.xlu0 %v422
        %v424 = vpop.xlane.xlu0 %423
        %v425 = vmul.f32 %v415, 0.00390625
        %v426 = vmul.f32 %v418, 0.00390625
        %v427 = vmul.f32 %v421, 0.00390625
        %v428 = vmul.f32 %v424, 0.00390625
        %v429 = vsub.f32 %v363, %v425
        %v430 = vsub.f32 %v370, %v425
        %v431 = vsub.f32 %v377, %v426
        %v432 = vsub.f32 %v384, %v426
        %v433 = vsub.f32 %v391, %v427
        %v434 = vsub.f32 %v398, %v427
        %v435 = vsub.f32 %v405, %v428
        %v436 = vsub.f32 %v412, %v428
        %v437 = vmul.f32 %v429, %v429
        %v438 = vmul.f32 %v430, %v430
        %v439 = vmul.f32 %v431, %v431
        %v440 = vmul.f32 %v432, %v432
        %v441 = vmul.f32 %v433, %v433
        %v442 = vmul.f32 %v434, %v434
        %v443 = vmul.f32 %v435, %v435
        %v444 = vmul.f32 %v436, %v436
        %v445 = vadd.f32 %v437, %v438
        %446 = vadd.xlane.f32.xlu0 %v445
        %v447 = vpop.xlane.xlu0 %446
        %v448 = vadd.f32 %v439, %v440
        %449 = vadd.xlane.f32.xlu0 %v448
        %v450 = vpop.xlane.xlu0 %449
        %v451 = vadd.f32 %v441, %v442
        %452 = vadd.xlane.f32.xlu0 %v451
        %v453 = vpop.xlane.xlu0 %452
        %v454 = vadd.f32 %v443, %v444
        %455 = vadd.xlane.f32.xlu0 %v454
        %v456 = vpop.xlane.xlu0 %455
        %v457 = vmul.f32 %v447, 0.003921569
        %v458 = vmul.f32 %v450, 0.003921569
        %v459 = vmul.f32 %v453, 0.003921569
        %v460 = vmul.f32 %v456, 0.003921569
        %v461 = vrsqrt.pop %v457
        %v462 = vmul.f32 %v461, %v457
        %v463 = vmul.f32 %v462, %v461
        %v464 = vmul.f32 0.5, %v463
        %v465 = vsub.f32 1.5, %v464
        %v466 = vmul.f32 %v461, %v465
        %v467 = vmul.f32 %v457, %v466
        %vm468 = vcmp.eq.f32.partialorder %v457, inf
        %v469 = vsel %vm468, %v457, %v467
        %vm470 = vcmp.eq.f32.partialorder %v457, 0.0
        %v471 = vand.u32 %v457, 2147483648
        %v472 = vsel %vm470, %v471, %v469
        %v473 = vrsqrt.pop %v458
        %v474 = vmul.f32 %v473, %v458
        %v475 = vmul.f32 %v474, %v473
        %v476 = vmul.f32 0.5, %v475
        %v477 = vsub.f32 1.5, %v476
        %v478 = vmul.f32 %v473, %v477
        %v479 = vmul.f32 %v458, %v478
        %vm480 = vcmp.eq.f32.partialorder %v458, inf
        %v481 = vsel %vm480, %v458, %v479
        %vm482 = vcmp.eq.f32.partialorder %v458, 0.0
        %v483 = vand.u32 %v458, 2147483648
        %v484 = vsel %vm482, %v483, %v481
        %v485 = vrsqrt.pop %v459
        %v486 = vmul.f32 %v485, %v459
        %v487 = vmul.f32 %v486, %v485
        %v488 = vmul.f32 0.5, %v487
        %v489 = vsub.f32 1.5, %v488
        %v490 = vmul.f32 %v485, %v489
        %v491 = vmul.f32 %v459, %v490
        %vm492 = vcmp.eq.f32.partialorder %v459, inf
        %v493 = vsel %vm492, %v459, %v491
        %vm494 = vcmp.eq.f32.partialorder %v459, 0.0
        %v495 = vand.u32 %v459, 2147483648
        %v496 = vsel %vm494, %v495, %v493
        %v497 = vrsqrt.pop %v460
        %v498 = vmul.f32 %v497, %v460
        %v499 = vmul.f32 %v498, %v497
        %v500 = vmul.f32 0.5, %v499
        %v501 = vsub.f32 1.5, %v500
        %v502 = vmul.f32 %v497, %v501
        %v503 = vmul.f32 %v460, %v502
        %vm504 = vcmp.eq.f32.partialorder %v460, inf
        %v505 = vsel %vm504, %v460, %v503
        %vm506 = vcmp.eq.f32.partialorder %v460, 0.0
        %v507 = vand.u32 %v460, 2147483648
        %v508 = vsel %vm506, %v507, %v505
        %v509 = vadd.f32 %v472, 1e-05
        %v510 = vadd.f32 %v484, 1e-05
        %v511 = vadd.f32 %v496, 1e-05
        %v512 = vadd.f32 %v508, 1e-05
        %v513 = vld [vmem:[%s240] sm:$0x1]
        %v514 = vld [vmem:[%s240 + $0x1] sm:$0x1]
        %v515 = vld [vmem:[%s240 + $0x2] sm:$0x1]
        %v516 = vld [vmem:[%s240 + $0x3] sm:$0x1]
        %v517 = vrcp.pop %v509
        %v518 = vmul.f32 %v509, %v517
        %v519 = vsub.f32 1.0, %v518
        %v520 = vmul.f32 %v517, %v519
        %v521 = vadd.f32 %v517, %v520
        %vm522 = vweird.f32 %v509
        %vm523 = vweird.f32 %v517
        %vm524 = vmor %vm522, %vm523
        %v525 = vsel %vm524, %v517, %v521
        %v526 = vand.u32 2147483647, %v509
        %vm527 = vcmp.eq.f32.partialorder %v526, 8.507059e+37
        %v528 = vand.u32 %v509, 2147483648
        %v529 = vor.u32 1.1754944e-38, %v528
        %v530 = vsel %vm527, %v529, %v525
        %v531 = vmul.f32 %v513, %v530
        %v532 = vrcp.pop %v510
        %v533 = vmul.f32 %v510, %v532
        %v534 = vsub.f32 1.0, %v533
        %v535 = vmul.f32 %v532, %v534
        %v536 = vadd.f32 %v532, %v535
        %vm537 = vweird.f32 %v510
        %vm538 = vweird.f32 %v532
        %vm539 = vmor %vm537, %vm538
        %v540 = vsel %vm539, %v532, %v536
        %v541 = vand.u32 2147483647, %v510
        %vm542 = vcmp.eq.f32.partialorder %v541, 8.507059e+37
        %v543 = vand.u32 %v510, 2147483648
        %v544 = vor.u32 1.1754944e-38, %v543
        %v545 = vsel %vm542, %v544, %v540
        %v546 = vmul.f32 %v514, %v545
        %v547 = vrcp.pop %v511
        %v548 = vmul.f32 %v511, %v547
        %v549 = vsub.f32 1.0, %v548
        %v550 = vmul.f32 %v547, %v549
        %v551 = vadd.f32 %v547, %v550
        %vm552 = vweird.f32 %v511
        %vm553 = vweird.f32 %v547
        %vm554 = vmor %vm552, %vm553
        %v555 = vsel %vm554, %v547, %v551
        %v556 = vand.u32 2147483647, %v511
        %vm557 = vcmp.eq.f32.partialorder %v556, 8.507059e+37
        %v558 = vand.u32 %v511, 2147483648
        %v559 = vor.u32 1.1754944e-38, %v558
        %v560 = vsel %vm557, %v559, %v555
        %v561 = vmul.f32 %v515, %v560
        %v562 = vrcp.pop %v512
        %v563 = vmul.f32 %v512, %v562
        %v564 = vsub.f32 1.0, %v563
        %v565 = vmul.f32 %v562, %v564
        %v566 = vadd.f32 %v562, %v565
        %vm567 = vweird.f32 %v512
        %vm568 = vweird.f32 %v562
        %vm569 = vmor %vm567, %vm568
        %v570 = vsel %vm569, %v562, %v566
        %v571 = vand.u32 2147483647, %v512
        %vm572 = vcmp.eq.f32.partialorder %v571, 8.507059e+37
        %v573 = vand.u32 %v512, 2147483648
        %v574 = vor.u32 1.1754944e-38, %v573
        %v575 = vsel %vm572, %v574, %v570
        %v576 = vmul.f32 %v516, %v575
        %578 = vset.pattern.permute.xlu0 0
        %579 = vperm.xlu0 %578, %v531
        %v580 = vpop.permute.xlu0 %579
        %v582 = vperm.slane %v580, 0
        %584 = vset.pattern.permute.xlu0 0
        %585 = vperm.xlu0 %584, %v546
        %v586 = vpop.permute.xlu0 %585
        %v588 = vperm.slane %v586, 0
        %590 = vset.pattern.permute.xlu0 0
        %591 = vperm.xlu0 %590, %v561
        %v592 = vpop.permute.xlu0 %591
        %v594 = vperm.slane %v592, 0
        %596 = vset.pattern.permute.xlu0 0
        %597 = vperm.xlu0 %596, %v576
        %v598 = vpop.permute.xlu0 %597
        %v600 = vperm.slane %v598, 0
        %v601 = vmul.f32 %v429, %v582
        %v602 = vmul.f32 %v430, %v582
        %v603 = vmul.f32 %v431, %v588
        %v604 = vmul.f32 %v432, %v588
        %v605 = vmul.f32 %v433, %v594
        %v606 = vmul.f32 %v434, %v594
        %v607 = vmul.f32 %v435, %v600
        %v608 = vmul.f32 %v436, %v600
        %v609 = vld [vmem:[%s244] sm:$0x1]
        %v610 = vld [vmem:[%s244 + $0x1] sm:$0x1]
        %v611 = vld [vmem:[%s244 + $0x2] sm:$0x1]
        %v612 = vld [vmem:[%s244 + $0x3] sm:$0x1]
        %614 = vset.pattern.permute.xlu0 0
        %615 = vperm.xlu0 %614, %v609
        %v616 = vpop.permute.xlu0 %615
        %v618 = vperm.slane %v616, 0
        %620 = vset.pattern.permute.xlu0 0
        %621 = vperm.xlu0 %620, %v610
        %v622 = vpop.permute.xlu0 %621
        %v624 = vperm.slane %v622, 0
        %626 = vset.pattern.permute.xlu0 0
        %627 = vperm.xlu0 %626, %v611
        %v628 = vpop.permute.xlu0 %627
        %v630 = vperm.slane %v628, 0
        %632 = vset.pattern.permute.xlu0 0
        %633 = vperm.xlu0 %632, %v612
        %v634 = vpop.permute.xlu0 %633
        %v636 = vperm.slane %v634, 0
        %v637 = vadd.f32 %v601, %v618
        %v638 = vadd.f32 %v602, %v618
        %v639 = vadd.f32 %v603, %v624
        %v640 = vadd.f32 %v604, %v624
        %v641 = vadd.f32 %v605, %v630
        %v642 = vadd.f32 %v606, %v630
        %v643 = vadd.f32 %v607, %v636
        %v644 = vadd.f32 %v608, %v636
        %v645 = vxor.u32 %v637, 2147483648
        %v646 = vxor.u32 %v638, 2147483648
        %v647 = vxor.u32 %v639, 2147483648
        %v648 = vxor.u32 %v640, 2147483648
        %v649 = vxor.u32 %v641, 2147483648
        %v650 = vxor.u32 %v642, 2147483648
        %v651 = vxor.u32 %v643, 2147483648
        %v652 = vxor.u32 %v644, 2147483648
        %v653 = vmul.f32 %v645, 1.442695
        %v654 = vpow.pop %v653
        %v655 = vmul.f32 %v646, 1.442695
        %v656 = vpow.pop %v655
        %v657 = vmul.f32 %v647, 1.442695
        %v658 = vpow.pop %v657
        %v659 = vmul.f32 %v648, 1.442695
        %v660 = vpow.pop %v659
        %v661 = vmul.f32 %v649, 1.442695
        %v662 = vpow.pop %v661
        %v663 = vmul.f32 %v650, 1.442695
        %v664 = vpow.pop %v663
        %v665 = vmul.f32 %v651, 1.442695
        %v666 = vpow.pop %v665
        %v667 = vmul.f32 %v652, 1.442695
        %v668 = vpow.pop %v667
        %v669 = vadd.f32 %v654, 1.0
        %v670 = vadd.f32 %v656, 1.0
        %v671 = vadd.f32 %v658, 1.0
        %v672 = vadd.f32 %v660, 1.0
        %v673 = vadd.f32 %v662, 1.0
        %v674 = vadd.f32 %v664, 1.0
        %v675 = vadd.f32 %v666, 1.0
        %v676 = vadd.f32 %v668, 1.0
        %v677 = vrcp.pop %v669
        %v678 = vmul.f32 %v669, %v677
        %v679 = vsub.f32 1.0, %v678
        %v680 = vmul.f32 %v677, %v679
        %v681 = vadd.f32 %v677, %v680
        %vm682 = vweird.f32 %v669
        %vm683 = vweird.f32 %v677
        %vm684 = vmor %vm682, %vm683
        %v685 = vsel %vm684, %v677, %v681
        %v686 = vand.u32 2147483647, %v669
        %vm687 = vcmp.eq.f32.partialorder %v686, 8.507059e+37
        %v688 = vand.u32 %v669, 2147483648
        %v689 = vor.u32 1.1754944e-38, %v688
        %v690 = vsel %vm687, %v689, %v685
        %v691 = vmul.f32 1.0, %v690
        %v692 = vrcp.pop %v670
        %v693 = vmul.f32 %v670, %v692
        %v694 = vsub.f32 1.0, %v693
        %v695 = vmul.f32 %v692, %v694
        %v696 = vadd.f32 %v692, %v695
        %vm697 = vweird.f32 %v670
        %vm698 = vweird.f32 %v692
        %vm699 = vmor %vm697, %vm698
        %v700 = vsel %vm699, %v692, %v696
        %v701 = vand.u32 2147483647, %v670
        %vm702 = vcmp.eq.f32.partialorder %v701, 8.507059e+37
        %v703 = vand.u32 %v670, 2147483648
        %v704 = vor.u32 1.1754944e-38, %v703
        %v705 = vsel %vm702, %v704, %v700
        %v706 = vmul.f32 1.0, %v705
        %v707 = vrcp.pop %v671
        %v708 = vmul.f32 %v671, %v707
        %v709 = vsub.f32 1.0, %v708
        %v710 = vmul.f32 %v707, %v709
        %v711 = vadd.f32 %v707, %v710
        %vm712 = vweird.f32 %v671
        %vm713 = vweird.f32 %v707
        %vm714 = vmor %vm712, %vm713
        %v715 = vsel %vm714, %v707, %v711
        %v716 = vand.u32 2147483647, %v671
        %vm717 = vcmp.eq.f32.partialorder %v716, 8.507059e+37
        %v718 = vand.u32 %v671, 2147483648
        %v719 = vor.u32 1.1754944e-38, %v718
        %v720 = vsel %vm717, %v719, %v715
        %v721 = vmul.f32 1.0, %v720
        %v722 = vrcp.pop %v672
        %v723 = vmul.f32 %v672, %v722
        %v724 = vsub.f32 1.0, %v723
        %v725 = vmul.f32 %v722, %v724
        %v726 = vadd.f32 %v722, %v725
        %vm727 = vweird.f32 %v672
        %vm728 = vweird.f32 %v722
        %vm729 = vmor %vm727, %vm728
        %v730 = vsel %vm729, %v722, %v726
        %v731 = vand.u32 2147483647, %v672
        %vm732 = vcmp.eq.f32.partialorder %v731, 8.507059e+37
        %v733 = vand.u32 %v672, 2147483648
        %v734 = vor.u32 1.1754944e-38, %v733
        %v735 = vsel %vm732, %v734, %v730
        %v736 = vmul.f32 1.0, %v735
        %v737 = vrcp.pop %v673
        %v738 = vmul.f32 %v673, %v737
        %v739 = vsub.f32 1.0, %v738
        %v740 = vmul.f32 %v737, %v739
        %v741 = vadd.f32 %v737, %v740
        %vm742 = vweird.f32 %v673
        %vm743 = vweird.f32 %v737
        %vm744 = vmor %vm742, %vm743
        %v745 = vsel %vm744, %v737, %v741
        %v746 = vand.u32 2147483647, %v673
        %vm747 = vcmp.eq.f32.partialorder %v746, 8.507059e+37
        %v748 = vand.u32 %v673, 2147483648
        %v749 = vor.u32 1.1754944e-38, %v748
        %v750 = vsel %vm747, %v749, %v745
        %v751 = vmul.f32 1.0, %v750
        %v752 = vrcp.pop %v674
        %v753 = vmul.f32 %v674, %v752
        %v754 = vsub.f32 1.0, %v753
        %v755 = vmul.f32 %v752, %v754
        %v756 = vadd.f32 %v752, %v755
        %vm757 = vweird.f32 %v674
        %vm758 = vweird.f32 %v752
        %vm759 = vmor %vm757, %vm758
        %v760 = vsel %vm759, %v752, %v756
        %v761 = vand.u32 2147483647, %v674
        %vm762 = vcmp.eq.f32.partialorder %v761, 8.507059e+37
        %v763 = vand.u32 %v674, 2147483648
        %v764 = vor.u32 1.1754944e-38, %v763
        %v765 = vsel %vm762, %v764, %v760
        %v766 = vmul.f32 1.0, %v765
        %v767 = vrcp.pop %v675
        %v768 = vmul.f32 %v675, %v767
        %v769 = vsub.f32 1.0, %v768
        %v770 = vmul.f32 %v767, %v769
        %v771 = vadd.f32 %v767, %v770
        %vm772 = vweird.f32 %v675
        %vm773 = vweird.f32 %v767
        %vm774 = vmor %vm772, %vm773
        %v775 = vsel %vm774, %v767, %v771
        %v776 = vand.u32 2147483647, %v675
        %vm777 = vcmp.eq.f32.partialorder %v776, 8.507059e+37
        %v778 = vand.u32 %v675, 2147483648
        %v779 = vor.u32 1.1754944e-38, %v778
        %v780 = vsel %vm777, %v779, %v775
        %v781 = vmul.f32 1.0, %v780
        %v782 = vrcp.pop %v676
        %v783 = vmul.f32 %v676, %v782
        %v784 = vsub.f32 1.0, %v783
        %v785 = vmul.f32 %v782, %v784
        %v786 = vadd.f32 %v782, %v785
        %vm787 = vweird.f32 %v676
        %vm788 = vweird.f32 %v782
        %vm789 = vmor %vm787, %vm788
        %v790 = vsel %vm789, %v782, %v786
        %v791 = vand.u32 2147483647, %v676
        %vm792 = vcmp.eq.f32.partialorder %v791, 8.507059e+37
        %v793 = vand.u32 %v676, 2147483648
        %v794 = vor.u32 1.1754944e-38, %v793
        %v795 = vsel %vm792, %v794, %v790
        %v796 = vmul.f32 1.0, %v795
        %v805 = vrot.slane %v706, 4
        %v806 = vrot.slane %v736, 4
        %v807 = vrot.slane %v766, 4
        %v808 = vrot.slane %v796, 4
        %v809 = vsel %vm277, %v691, %v805
        %v810 = vsel %vm277, %v721, %v806
        %v811 = vsel %vm277, %v751, %v807
        %v812 = vsel %vm277, %v781, %v808
        %v817 = vmul.f32 %v246, %v809
        %v818 = vmul.f32 %v247, %v810
        %v819 = vmul.f32 %v248, %v811
        %v820 = vmul.f32 %v249, %v812
        %821 = vst [vmem:[%s235] sm:$0xff] %v817
        %822 = vst [vmem:[%s235 + $0x8] sm:$0xff] %v818
        %823 = vst [vmem:[%s235 + $0x10] sm:$0xff] %v819
        %824 = vst [vmem:[%s235 + $0x18] sm:$0xff] %v820
        %s825 = sand.u32 %s122, 1
        %s826 = scalar_lea.sflag [#allocation4], %s825
        %s827 = sand.u32 %s122, 1
        %s828 = smul.addr %s827, 32
        %s829 = scalar_lea.vmem [#allocation5], %s828
        // Predicated region
        $region37: #{tpu_custom_call.1} parent=31 // pred_check
          %p830 = pneg %p132
        $region38: #{tpu_custom_call.1} parent=31 // pred_check_branch
          %832 = sbr.rel (%p830) target = $region40
        $region39: #{tpu_custom_call.1} parent=31 // pred_region
          %s833 = smul.u32 4, %s25
          %835 = vsyncadd %s826, 0
          %s836 = smul.addr %s833, 2
          %s837 = smul.addr %s24, 8
          %s838 = sadd.s32 %s836, %s837
          %s839 = smul.addr %s838, 4
          %s840 = scalar_lea.hbm %s3, %s839
          %s841 = sshll.u32 %s829, 4
          %s842 = int_to_ptr.vmem [resolvable:$true] %s841
          %s843 = sshll.u32 %s840, 4
          %s844 = int_to_ptr.hbm [resolvable:$true] %s843
          %849 = dma.vmem_to_hbm [thread:$0]  %s842, 512, %s844, %s826, 128, 128, 8
        $region40: #{tpu_custom_call.1} parent=31 // pred_fallthru
          _
      $region32: #{tpu_custom_call.1} parent=5 // pred_fallthru
        _
      %p850 = scmp.le.s32.totalorder 2, %s15
      // Predicated region
      $region41: #{tpu_custom_call.1} parent=5 // pred_check
        %p851 = pneg %p850
      $region42: #{tpu_custom_call.1} parent=5 // pred_check_branch
        %853 = sbr.rel (%p851) target = $region44
      $region43: #{tpu_custom_call.1} parent=5 // pred_region
        %s854 = ssub.s32 %s15, 2
        // Predicated region
        $region45: #{tpu_custom_call.1} parent=43 // pred_check
          %p855 = pneg %p138
        $region46: #{tpu_custom_call.1} parent=43 // pred_check_branch
          %857 = sbr.rel (%p855) target = $region48
        $region47: #{tpu_custom_call.1} parent=43 // pred_region
          %s858 = sand.u32 %s123, 1
          %s859 = scalar_lea.sflag [#allocation4], %s858
          %s860 = sand.u32 %s123, 1
          %s861 = smul.addr %s860, 32
          %s862 = scalar_lea.vmem [#allocation5], %s861
          %864 = dma.done %s859, 512
        $region48: #{tpu_custom_call.1} parent=43 // pred_fallthru
          _
      $region44: #{tpu_custom_call.1} parent=5 // pred_fallthru
        _
    $region6: #{tpu_custom_call.1} parent=1 // loop_footer
      %s19 = sadd.s32 1, %s15
    $region7: #{tpu_custom_call.1} parent=1 // loop_footer_branch
      %14 = sbr.rel target = $region3
    $region8: #{tpu_custom_call.1} parent=1 // loop_exit
      _
    %865 = vsyncpa [#allocation3], 1
    %s866 = scalar_lea.sflag [#allocation3], 1
    %867 = vsyncpa %s866, 1
    %868 = vsyncpa [#allocation4], 1
    %s869 = scalar_lea.sflag [#allocation4], 1
    %870 = vsyncpa %s869, 1

</llo_original>
